<compile_context>
chip_gen: v5e
topology: v5e:2x2
jax: 0.10.0
libtpu: 0.0.40
codegen_flags: <defaults>
</compile_context>

<pallas_src>
import functools

import jax
import jax.numpy as jnp
import numpy as np
from jax.experimental import pallas as pl
from jax.experimental.pallas import tpu as pltpu


# --------------------------------------------------------------------------
# Fused Pallas kernel: one image (one batch element) per grid step.
# --------------------------------------------------------------------------
def mmca_kernel(x_ref, wdr_ref, bdr_ref, wtaps_ref, scal_ref,
                o_ref, pbuf_ref, *, W, M):
    # Layout: channels on sublanes, flattened spatial H*W on lanes.
    #   x_ref    : (1, C, HW)     original input (residual path)
    #   wdr_ref  : (Cd, C)        DR 1x1 conv weight with BN folded in
    #   bdr_ref  : (Cd, 1)        folded DR bias
    #   wtaps_ref: (NT, Cd)       pre-mix matrix; row 0 = MRA1 tap,
    #                             rows 1..9 = MRA3 taps (t = dh*3+dw),
    #                             rows 10..34 = MRA5 taps (t = dh*5+dw),
    #                             rows 35.. = zero padding
    #   scal_ref : SMEM (8,)      [b1, b3, b5, wl0, wl1, wl2, bl, 0]
    #   o_ref    : (1, C, HW)
    #   pbuf_ref : (NT, HW+2M)    VMEM scratch; zero margins give the convs'
    #                             zero padding along H, lane masks handle W.
    HW = x_ref.shape[2]
    NT = pbuf_ref.shape[0]
    f32 = jnp.float32

    x = x_ref[0]                                                    # (C, HW)

    # ---- DR: 1x1 conv (+ folded BN) + ReLU  (MXU matmul #1) ---------------
    y = jnp.dot(wdr_ref[...], x, preferred_element_type=f32) + bdr_ref[...]
    y = jnp.maximum(y, 0.0)                                         # (Cd, HW)

    # ---- channel pre-mix for all 35 attention taps (MXU matmul #2) --------
    P = jnp.dot(wtaps_ref[...], y, preferred_element_type=f32)      # (NT, HW)

    # Stage P in a zero-margined scratch.  Only the margin bands are zeroed
    # (the interior is fully overwritten every step; zeroing every step keeps
    # this correct under the "parallel" batch axis on megacore parts).
    pbuf_ref[:, pl.ds(0, M)] = jnp.zeros((NT, M), f32)
    pbuf_ref[:, pl.ds(M + HW, M)] = jnp.zeros((NT, M), f32)
    pbuf_ref[:, pl.ds(M, HW)] = P

    # Scalar params from SMEM.
    b1 = scal_ref[0]
    b3 = scal_ref[1]
    b5 = scal_ref[2]
    wl0 = scal_ref[3]
    wl1 = scal_ref[4]
    wl2 = scal_ref[5]
    bl = scal_ref[6]

    # Column (w) index of every lane; the 4 distinct W-edge masks (tw=+-1,+-2)
    # are built once and reused by both MRA3 and MRA5.
    wcol = jax.lax.broadcasted_iota(jnp.int32, (1, HW), 1) % W      # (1, HW)
    masks = {tw: (wcol + tw >= 0) & (wcol + tw < W) for tw in (-2, -1, 1, 2)}

    # ---- MRA1: 1x1 attention conv is just row 0 of the pre-mix ------------
    a1 = jnp.maximum(P[0:1, :] + b1, 0.0)                           # (1, HW)

    # ---- MRA3 / MRA5: kxk convs as shifted (1,HW) adds over the scratch ---
    def mra(k, row0, bias):
        r = k // 2
        acc = None
        for dw in range(k):
            tw = dw - r
            col = None
            for dh in range(k):
                d = (dh - r) * W + tw
                t = dh * k + dw
                tap = pbuf_ref[pl.ds(row0 + t, 1), pl.ds(M + d, HW)]  # (1,HW)
                col = tap if col is None else col + tap
            if tw != 0:   # same lane validity for all dh in this column group
                col = jnp.where(masks[tw], col, 0.0)
            acc = col if acc is None else acc + col
        return jnp.maximum(acc + bias, 0.0)                         # (1, HW)

    a3 = mra(3, 1, b3)
    a5 = mra(5, 10, b5)

    # ---- last_conv (1x1 over [a1,a3,a5]) + sigmoid + residual gate --------
    att = jax.nn.sigmoid(wl0 * a1 + wl1 * a3 + wl2 * a5 + bl)       # (1, HW)
    o_ref[0] = x * (1.0 - att)                                      # (C, HW)


# --------------------------------------------------------------------------
# Wrapper
# --------------------------------------------------------------------------
@jax.jit
def mmca_forward(x_nchw, wdr, bdr, wtaps, scalars):
    B, C, H, W = x_nchw.shape
    Cd = wdr.shape[0]
    NT = wtaps.shape[0]
    HW = H * W
    # Margin >= 2*W+2 (largest 5x5 shift), rounded to a lane multiple so the
    # interior store into the scratch stays lane-aligned.
    M = ((2 * W + 2 + 127) // 128) * 128

    x_flat = x_nchw.reshape(B, C, HW)          # NCHW -> (B, C, H*W), no transpose

    out_flat = pl.pallas_call(
        functools.partial(mmca_kernel, W=W, M=M),
        out_shape=jax.ShapeDtypeStruct((B, C, HW), jnp.float32),
        grid=(B,),
        in_specs=[
            pl.BlockSpec((1, C, HW), lambda b: (b, 0, 0)),   # x
            pl.BlockSpec((Cd, C), lambda b: (0, 0)),         # folded DR weight
            pl.BlockSpec((Cd, 1), lambda b: (0, 0)),         # folded DR bias
            pl.BlockSpec((NT, Cd), lambda b: (0, 0)),        # pre-mix tap weights
            pl.BlockSpec(memory_space=pltpu.MemorySpace.SMEM),  # scalars
        ],
        out_specs=pl.BlockSpec((1, C, HW), lambda b: (b, 0, 0)),
        scratch_shapes=[pltpu.VMEM((NT, HW + 2 * M), jnp.float32)],
        compiler_params=pltpu.CompilerParams(
            dimension_semantics=("parallel",)),
    )(x_flat, wdr, bdr, wtaps, scalars)

    return out_flat.reshape(B, C, H, W)


# --------------------------------------------------------------------------
# Pure-JAX reference (for correctness checking)
# --------------------------------------------------------------------------
def mmca_reference(x_nchw, raw):
    eps = 1e-5
    x = jnp.transpose(x_nchw, (0, 2, 3, 1))  # NHWC

    def conv(inp, wt_oihw, bias, pad):
        w_hwio = jnp.transpose(wt_oihw, (2, 3, 1, 0))
        out = jax.lax.conv_general_dilated(
            inp, w_hwio, (1, 1), [(pad, pad), (pad, pad)],
            dimension_numbers=("NHWC", "HWIO", "NHWC"))
        return out + bias

    y = conv(x, raw["dr_w"], raw["dr_b"], 0)
    scale = raw["bn_g"] / jnp.sqrt(raw["bn_v"] + eps)
    y = (y - raw["bn_m"]) * scale + raw["bn_b"]
    y = jnp.maximum(y, 0.0)

    a1 = jnp.maximum(conv(y, raw["w1"], raw["b1"], 0), 0.0)
    a3 = jnp.maximum(conv(y, raw["w3"], raw["b3"], 1), 0.0)
    a5 = jnp.maximum(conv(y, raw["w5"], raw["b5"], 2), 0.0)
    cat = jnp.concatenate([a1, a3, a5], axis=-1)
    att = jax.nn.sigmoid(conv(cat, raw["wl"], raw["bl"], 0))
    out = x - x * att
    return jnp.transpose(out, (0, 3, 1, 2))


# --------------------------------------------------------------------------
# Deterministic parameters (PyTorch shapes) + folding for the kernel layout
# --------------------------------------------------------------------------
def make_params(key, C, Cd):
    ks = jax.random.split(key, 12)
    raw = {
        "dr_w": 0.1 * jax.random.normal(ks[0], (Cd, C, 1, 1), jnp.float32),
        "dr_b": 0.1 * jax.random.normal(ks[1], (Cd,), jnp.float32),
        "bn_g": 1.0 + 0.1 * jax.random.normal(ks[2], (Cd,), jnp.float32),
        "bn_b": 0.1 * jax.random.normal(ks[3], (Cd,), jnp.float32),
        "bn_m": 0.1 * jax.random.normal(ks[4], (Cd,), jnp.float32),
        "bn_v": 0.5 + jnp.abs(jax.random.normal(ks[5], (Cd,), jnp.float32)),
        "w1": 0.2 * jax.random.normal(ks[6], (1, Cd, 1, 1), jnp.float32),
        "b1": 0.1 * jax.random.normal(ks[7], (1,), jnp.float32),
        "w3": 0.2 * jax.random.normal(ks[8], (1, Cd, 3, 3), jnp.float32),
        "b3": 0.1 * jax.random.normal(ks[9], (1,), jnp.float32),
        "w5": 0.2 * jax.random.normal(ks[10], (1, Cd, 5, 5), jnp.float32),
        "b5": 0.1 * jax.random.normal(ks[11], (1,), jnp.float32),
        "wl": jnp.array([[[[0.7]], [[0.9]], [[1.1]]]], jnp.float32),  # (1,3,1,1)
        "bl": jnp.array([0.05], jnp.float32),
    }

    eps = 1e-5
    scale = raw["bn_g"] / jnp.sqrt(raw["bn_v"] + eps)                 # (Cd,)
    # fold eval-mode BatchNorm into the 1x1 DR conv (channel-major layout)
    wdr = raw["dr_w"][:, :, 0, 0] * scale[:, None]                    # (Cd, C)
    bdr = ((raw["dr_b"] - raw["bn_m"]) * scale + raw["bn_b"]).reshape(Cd, 1)

    # Pre-mix tap matrix: row t selects the (Cd,) channel vector of that tap.
    w1_row = raw["w1"][0, :, 0, 0].reshape(1, Cd)                     # (1, Cd)
    w3_rows = jnp.transpose(raw["w3"][0], (1, 2, 0)).reshape(9, Cd)   # t=dh*3+dw
    w5_rows = jnp.transpose(raw["w5"][0], (1, 2, 0)).reshape(25, Cd)  # t=dh*5+dw
    NT = 40                                    # 1 + 9 + 25 = 35, sublane-padded
    wtaps = jnp.concatenate(
        [w1_row, w3_rows, w5_rows, jnp.zeros((NT - 35, Cd), jnp.float32)],
        axis=0)                                                       # (NT, Cd)

    scalars = jnp.array(
        [raw["b1"][0], raw["b3"][0], raw["b5"][0],
         raw["wl"][0, 0, 0, 0], raw["wl"][0, 1, 0, 0], raw["wl"][0, 2, 0, 0],
         raw["bl"][0], 0.0], dtype=jnp.float32)

    return raw, (wdr, bdr, wtaps, scalars)


# --------------------------------------------------------------------------
if __name__ == "__main__":
    B, C, H, W = 2, 64, 16, 16        # input_channels=64, reduction=[16] -> Cd=4
    Cd = C // 16

    key = jax.random.PRNGKey(0)
    kx, kp = jax.random.split(key)
    x = jax.random.normal(kx, (B, C, H, W), jnp.float32)

    raw, folded = make_params(kp, C, Cd)

    out = mmca_forward(x, *folded)
    out = jax.block_until_ready(out)

    ref = jax.block_until_ready(mmca_reference(x, raw))

    assert out.shape == (B, C, H, W)
    np.testing.assert_allclose(np.asarray(out), np.asarray(ref),
                               rtol=1e-2, atol=1e-2)
    print("KERNEL_OK")
</pallas_src>

<mosaic_0001>
module attributes {stable_mosaic.version = 11 : i64} {
  func.func @mmca_kernel(%arg0: i32, %arg1: memref<1x64x256xf32, #tpu.memory_space<vmem>>, %arg2: memref<4x64xf32, #tpu.memory_space<vmem>>, %arg3: memref<4x1xf32, #tpu.memory_space<vmem>>, %arg4: memref<40x4xf32, #tpu.memory_space<vmem>>, %arg5: memref<8xf32, #tpu.memory_space<smem>>, %arg6: memref<1x64x256xf32, #tpu.memory_space<vmem>>, %arg7: memref<40x512xf32, #tpu.memory_space<vmem>>) attributes {dimension_semantics = [#tpu.dimension_semantics<parallel>], iteration_bounds = array<i64: 2>, scalar_prefetch = 0 : i64, scratch_operands = 1 : i64, tpu.core_type = #tpu.core_type<tc>, window_params = [{transform_indices = @transform_0, window_bounds = array<i64: 1, 64, 256>}, {pipeline_mode = #tpu.pipeline_mode<synchronous>, transform_indices = @transform_1, window_bounds = array<i64: 4, 64>}, {pipeline_mode = #tpu.pipeline_mode<synchronous>, transform_indices = @transform_2, window_bounds = array<i64: 4, 1>}, {pipeline_mode = #tpu.pipeline_mode<synchronous>, transform_indices = @transform_3, window_bounds = array<i64: 40, 4>}, {transform_indices = @transform_4, window_bounds = array<i64: 8>}, {transform_indices = @transform_5, window_bounds = array<i64: 1, 64, 256>}]} {
    %c0 = arith.constant 0 : index
    %c0_0 = arith.constant 0 : index
    %c0_1 = arith.constant 0 : index
    %0 = vector.load %arg1[%c0, %c0_0, %c0_1] : memref<1x64x256xf32, #tpu.memory_space<vmem>>, vector<1x64x256xf32>
    %1 = vector.shape_cast %0 : vector<1x64x256xf32> to vector<64x256xf32>
    %c0_2 = arith.constant 0 : index
    %c0_3 = arith.constant 0 : index
    %2 = vector.load %arg2[%c0_2, %c0_3] : memref<4x64xf32, #tpu.memory_space<vmem>>, vector<4x64xf32>
    %cst = arith.constant dense<0.000000e+00> : vector<4x256xf32>
    %3 = tpu.matmul %2, %1, %cst {dimension_numbers = #tpu.dot_dimension_numbers<[1], [0], [0], [1], [0, 0, 1, 1], [], []>} : vector<4x64xf32>, vector<64x256xf32>, vector<4x256xf32> -> vector<4x256xf32>
    %c0_4 = arith.constant 0 : index
    %c0_5 = arith.constant 0 : index
    %4 = vector.load %arg3[%c0_4, %c0_5] : memref<4x1xf32, #tpu.memory_space<vmem>>, vector<4x1xf32>
    %5 = vector.broadcast %4 : vector<4x1xf32> to vector<4x256xf32>
    %6 = arith.addf %3, %5 : vector<4x256xf32>
    %cst_6 = arith.constant 0.000000e+00 : f32
    %7 = vector.broadcast %cst_6 : f32 to vector<4x256xf32>
    %8 = arith.maximumf %6, %7 : vector<4x256xf32>
    %c0_7 = arith.constant 0 : index
    %c0_8 = arith.constant 0 : index
    %9 = vector.load %arg4[%c0_7, %c0_8] : memref<40x4xf32, #tpu.memory_space<vmem>>, vector<40x4xf32>
    %cst_9 = arith.constant dense<0.000000e+00> : vector<40x256xf32>
    %10 = tpu.matmul %9, %8, %cst_9 {dimension_numbers = #tpu.dot_dimension_numbers<[1], [0], [0], [1], [0, 0, 1, 1], [], []>} : vector<40x4xf32>, vector<4x256xf32>, vector<40x256xf32> -> vector<40x256xf32>
    %cst_10 = arith.constant 0.000000e+00 : f32
    %11 = vector.broadcast %cst_10 : f32 to vector<40x128xf32>
    %c0_11 = arith.constant 0 : index
    %c0_12 = arith.constant 0 : index
    %12 = vector.load %arg7[%c0_11, %c0_12] : memref<40x512xf32, #tpu.memory_space<vmem>>, vector<40x128xf32>
    tpu.vector_store %arg7[%c0_11, %c0_12], %11 {strides = array<i32>} : memref<40x512xf32, #tpu.memory_space<vmem>>, vector<40x128xf32>,
    %cst_13 = arith.constant 0.000000e+00 : f32
    %13 = vector.broadcast %cst_13 : f32 to vector<40x128xf32>
    %c0_14 = arith.constant 0 : index
    %c384 = arith.constant 384 : index
    %14 = vector.load %arg7[%c0_14, %c384] : memref<40x512xf32, #tpu.memory_space<vmem>>, vector<40x128xf32>
    tpu.vector_store %arg7[%c0_14, %c384], %13 {strides = array<i32>} : memref<40x512xf32, #tpu.memory_space<vmem>>, vector<40x128xf32>,
    %c0_15 = arith.constant 0 : index
    %c128 = arith.constant 128 : index
    %15 = vector.load %arg7[%c0_15, %c128] : memref<40x512xf32, #tpu.memory_space<vmem>>, vector<40x256xf32>
    tpu.vector_store %arg7[%c0_15, %c128], %10 {strides = array<i32>} : memref<40x512xf32, #tpu.memory_space<vmem>>, vector<40x256xf32>,
    %c0_16 = arith.constant 0 : index
    %16 = memref.load %arg5[%c0_16] : memref<8xf32, #tpu.memory_space<smem>>
    %c1 = arith.constant 1 : index
    %17 = memref.load %arg5[%c1] : memref<8xf32, #tpu.memory_space<smem>>
    %c2 = arith.constant 2 : index
    %18 = memref.load %arg5[%c2] : memref<8xf32, #tpu.memory_space<smem>>
    %c3 = arith.constant 3 : index
    %19 = memref.load %arg5[%c3] : memref<8xf32, #tpu.memory_space<smem>>
    %c4 = arith.constant 4 : index
    %20 = memref.load %arg5[%c4] : memref<8xf32, #tpu.memory_space<smem>>
    %c5 = arith.constant 5 : index
    %21 = memref.load %arg5[%c5] : memref<8xf32, #tpu.memory_space<smem>>
    %c6 = arith.constant 6 : index
    %22 = memref.load %arg5[%c6] : memref<8xf32, #tpu.memory_space<smem>>
    %23 = tpu.iota {dimensions = array<i32: 1>} : vector<1x256xi32>
    %c16_i32 = arith.constant 16 : i32
    %c0_i32 = arith.constant 0 : i32
    %24 = arith.cmpi eq, %c16_i32, %c0_i32 : i32
    %c1_i32 = arith.constant 1 : i32
    %25 = arith.select %24, %c1_i32, %c16_i32 : i32
    %26 = vector.broadcast %25 : i32 to vector<1x256xi32>
    %27 = arith.remsi %23, %26 : vector<1x256xi32>
    %c0_i32_17 = arith.constant 0 : i32
    %28 = vector.broadcast %c0_i32_17 : i32 to vector<1x256xi32>
    %29 = arith.cmpi ne, %27, %28 : vector<1x256xi32>
    %c0_i32_18 = arith.constant 0 : i32
    %30 = vector.broadcast %c0_i32_18 : i32 to vector<1x256xi32>
    %31 = arith.cmpi slt, %27, %30 : vector<1x256xi32>
    %c0_i32_19 = arith.constant 0 : i32
    %32 = arith.cmpi slt, %25, %c0_i32_19 : i32
    %33 = vector.broadcast %32 : i1 to vector<1x256xi1>
    %34 = vector.broadcast %33 : vector<1x256xi1> to vector<1x256xi1>
    %35 = arith.xori %31, %34 : vector<1x256xi1>
    %36 = arith.andi %35, %29 : vector<1x256xi1>
    %37 = vector.broadcast %25 : i32 to vector<1x256xi32>
    %38 = arith.addi %27, %37 : vector<1x256xi32>
    %39 = arith.select %36, %38, %27 : vector<1x256xi1>, vector<1x256xi32>
    %c-2_i32 = arith.constant -2 : i32
    %40 = vector.broadcast %c-2_i32 : i32 to vector<1x256xi32>
    %41 = arith.addi %39, %40 : vector<1x256xi32>
    %c0_i32_20 = arith.constant 0 : i32
    %42 = vector.broadcast %c0_i32_20 : i32 to vector<1x256xi32>
    %43 = arith.cmpi sge, %41, %42 : vector<1x256xi32>
    %c-2_i32_21 = arith.constant -2 : i32
    %44 = vector.broadcast %c-2_i32_21 : i32 to vector<1x256xi32>
    %45 = arith.addi %39, %44 : vector<1x256xi32>
    %c16_i32_22 = arith.constant 16 : i32
    %46 = vector.broadcast %c16_i32_22 : i32 to vector<1x256xi32>
    %47 = arith.cmpi slt, %45, %46 : vector<1x256xi32>
    %48 = arith.andi %43, %47 : vector<1x256xi1>
    %c-1_i32 = arith.constant -1 : i32
    %49 = vector.broadcast %c-1_i32 : i32 to vector<1x256xi32>
    %50 = arith.addi %39, %49 : vector<1x256xi32>
    %c0_i32_23 = arith.constant 0 : i32
    %51 = vector.broadcast %c0_i32_23 : i32 to vector<1x256xi32>
    %52 = arith.cmpi sge, %50, %51 : vector<1x256xi32>
    %c-1_i32_24 = arith.constant -1 : i32
    %53 = vector.broadcast %c-1_i32_24 : i32 to vector<1x256xi32>
    %54 = arith.addi %39, %53 : vector<1x256xi32>
    %c16_i32_25 = arith.constant 16 : i32
    %55 = vector.broadcast %c16_i32_25 : i32 to vector<1x256xi32>
    %56 = arith.cmpi slt, %54, %55 : vector<1x256xi32>
    %57 = arith.andi %52, %56 : vector<1x256xi1>
    %c1_i32_26 = arith.constant 1 : i32
    %58 = vector.broadcast %c1_i32_26 : i32 to vector<1x256xi32>
    %59 = arith.addi %39, %58 : vector<1x256xi32>
    %c0_i32_27 = arith.constant 0 : i32
    %60 = vector.broadcast %c0_i32_27 : i32 to vector<1x256xi32>
    %61 = arith.cmpi sge, %59, %60 : vector<1x256xi32>
    %c1_i32_28 = arith.constant 1 : i32
    %62 = vector.broadcast %c1_i32_28 : i32 to vector<1x256xi32>
    %63 = arith.addi %39, %62 : vector<1x256xi32>
    %c16_i32_29 = arith.constant 16 : i32
    %64 = vector.broadcast %c16_i32_29 : i32 to vector<1x256xi32>
    %65 = arith.cmpi slt, %63, %64 : vector<1x256xi32>
    %66 = arith.andi %61, %65 : vector<1x256xi1>
    %c2_i32 = arith.constant 2 : i32
    %67 = vector.broadcast %c2_i32 : i32 to vector<1x256xi32>
    %68 = arith.addi %39, %67 : vector<1x256xi32>
    %c0_i32_30 = arith.constant 0 : i32
    %69 = vector.broadcast %c0_i32_30 : i32 to vector<1x256xi32>
    %70 = arith.cmpi sge, %68, %69 : vector<1x256xi32>
    %c2_i32_31 = arith.constant 2 : i32
    %71 = vector.broadcast %c2_i32_31 : i32 to vector<1x256xi32>
    %72 = arith.addi %39, %71 : vector<1x256xi32>
    %c16_i32_32 = arith.constant 16 : i32
    %73 = vector.broadcast %c16_i32_32 : i32 to vector<1x256xi32>
    %74 = arith.cmpi slt, %72, %73 : vector<1x256xi32>
    %75 = arith.andi %70, %74 : vector<1x256xi1>
    %76 = vector.extract_strided_slice %10 {offsets = [0, 0], sizes = [1, 256], strides = [1, 1]} : vector<40x256xf32> to vector<1x256xf32>
    %77 = vector.broadcast %16 : f32 to vector<1x256xf32>
    %78 = arith.addf %76, %77 : vector<1x256xf32>
    %cst_33 = arith.constant 0.000000e+00 : f32
    %79 = vector.broadcast %cst_33 : f32 to vector<1x256xf32>
    %80 = arith.maximumf %78, %79 : vector<1x256xf32>
    %c1_34 = arith.constant 1 : index
    %c111 = arith.constant 111 : index
    %81 = vector.load %arg7[%c1_34, %c111] : memref<40x512xf32, #tpu.memory_space<vmem>>, vector<1x256xf32>
    %c4_35 = arith.constant 4 : index
    %c127 = arith.constant 127 : index
    %82 = vector.load %arg7[%c4_35, %c127] : memref<40x512xf32, #tpu.memory_space<vmem>>, vector<1x256xf32>
    %83 = arith.addf %81, %82 : vector<1x256xf32>
    %c7 = arith.constant 7 : index
    %c143 = arith.constant 143 : index
    %84 = vector.load %arg7[%c7, %c143] : memref<40x512xf32, #tpu.memory_space<vmem>>, vector<1x256xf32>
    %85 = arith.addf %83, %84 : vector<1x256xf32>
    %cst_36 = arith.constant 0.000000e+00 : f32
    %86 = vector.broadcast %cst_36 : f32 to vector<1x256xf32>
    %87 = arith.select %57, %85, %86 : vector<1x256xi1>, vector<1x256xf32>
    %c2_37 = arith.constant 2 : index
    %c112 = arith.constant 112 : index
    %88 = vector.load %arg7[%c2_37, %c112] : memref<40x512xf32, #tpu.memory_space<vmem>>, vector<1x256xf32>
    %c5_38 = arith.constant 5 : index
    %c128_39 = arith.constant 128 : index
    %89 = vector.load %arg7[%c5_38, %c128_39] : memref<40x512xf32, #tpu.memory_space<vmem>>, vector<1x256xf32>
    %90 = arith.addf %88, %89 : vector<1x256xf32>
    %c8 = arith.constant 8 : index
    %c144 = arith.constant 144 : index
    %91 = vector.load %arg7[%c8, %c144] : memref<40x512xf32, #tpu.memory_space<vmem>>, vector<1x256xf32>
    %92 = arith.addf %90, %91 : vector<1x256xf32>
    %93 = arith.addf %87, %92 : vector<1x256xf32>
    %c3_40 = arith.constant 3 : index
    %c113 = arith.constant 113 : index
    %94 = vector.load %arg7[%c3_40, %c113] : memref<40x512xf32, #tpu.memory_space<vmem>>, vector<1x256xf32>
    %c6_41 = arith.constant 6 : index
    %c129 = arith.constant 129 : index
    %95 = vector.load %arg7[%c6_41, %c129] : memref<40x512xf32, #tpu.memory_space<vmem>>, vector<1x256xf32>
    %96 = arith.addf %94, %95 : vector<1x256xf32>
    %c9 = arith.constant 9 : index
    %c145 = arith.constant 145 : index
    %97 = vector.load %arg7[%c9, %c145] : memref<40x512xf32, #tpu.memory_space<vmem>>, vector<1x256xf32>
    %98 = arith.addf %96, %97 : vector<1x256xf32>
    %cst_42 = arith.constant 0.000000e+00 : f32
    %99 = vector.broadcast %cst_42 : f32 to vector<1x256xf32>
    %100 = arith.select %66, %98, %99 : vector<1x256xi1>, vector<1x256xf32>
    %101 = arith.addf %93, %100 : vector<1x256xf32>
    %102 = vector.broadcast %17 : f32 to vector<1x256xf32>
    %103 = arith.addf %101, %102 : vector<1x256xf32>
    %cst_43 = arith.constant 0.000000e+00 : f32
    %104 = vector.broadcast %cst_43 : f32 to vector<1x256xf32>
    %105 = arith.maximumf %103, %104 : vector<1x256xf32>
    %c10 = arith.constant 10 : index
    %c94 = arith.constant 94 : index
    %106 = vector.load %arg7[%c10, %c94] : memref<40x512xf32, #tpu.memory_space<vmem>>, vector<1x256xf32>
    %c15 = arith.constant 15 : index
    %c110 = arith.constant 110 : index
    %107 = vector.load %arg7[%c15, %c110] : memref<40x512xf32, #tpu.memory_space<vmem>>, vector<1x256xf32>
    %108 = arith.addf %106, %107 : vector<1x256xf32>
    %c20 = arith.constant 20 : index
    %c126 = arith.constant 126 : index
    %109 = vector.load %arg7[%c20, %c126] : memref<40x512xf32, #tpu.memory_space<vmem>>, vector<1x256xf32>
    %110 = arith.addf %108, %109 : vector<1x256xf32>
    %c25 = arith.constant 25 : index
    %c142 = arith.constant 142 : index
    %111 = vector.load %arg7[%c25, %c142] : memref<40x512xf32, #tpu.memory_space<vmem>>, vector<1x256xf32>
    %112 = arith.addf %110, %111 : vector<1x256xf32>
    %c30 = arith.constant 30 : index
    %c158 = arith.constant 158 : index
    %113 = vector.load %arg7[%c30, %c158] : memref<40x512xf32, #tpu.memory_space<vmem>>, vector<1x256xf32>
    %114 = arith.addf %112, %113 : vector<1x256xf32>
    %cst_44 = arith.constant 0.000000e+00 : f32
    %115 = vector.broadcast %cst_44 : f32 to vector<1x256xf32>
    %116 = arith.select %48, %114, %115 : vector<1x256xi1>, vector<1x256xf32>
    %c11 = arith.constant 11 : index
    %c95 = arith.constant 95 : index
    %117 = vector.load %arg7[%c11, %c95] : memref<40x512xf32, #tpu.memory_space<vmem>>, vector<1x256xf32>
    %c16 = arith.constant 16 : index
    %c111_45 = arith.constant 111 : index
    %118 = vector.load %arg7[%c16, %c111_45] : memref<40x512xf32, #tpu.memory_space<vmem>>, vector<1x256xf32>
    %119 = arith.addf %117, %118 : vector<1x256xf32>
    %c21 = arith.constant 21 : index
    %c127_46 = arith.constant 127 : index
    %120 = vector.load %arg7[%c21, %c127_46] : memref<40x512xf32, #tpu.memory_space<vmem>>, vector<1x256xf32>
    %121 = arith.addf %119, %120 : vector<1x256xf32>
    %c26 = arith.constant 26 : index
    %c143_47 = arith.constant 143 : index
    %122 = vector.load %arg7[%c26, %c143_47] : memref<40x512xf32, #tpu.memory_space<vmem>>, vector<1x256xf32>
    %123 = arith.addf %121, %122 : vector<1x256xf32>
    %c31 = arith.constant 31 : index
    %c159 = arith.constant 159 : index
    %124 = vector.load %arg7[%c31, %c159] : memref<40x512xf32, #tpu.memory_space<vmem>>, vector<1x256xf32>
    %125 = arith.addf %123, %124 : vector<1x256xf32>
    %cst_48 = arith.constant 0.000000e+00 : f32
    %126 = vector.broadcast %cst_48 : f32 to vector<1x256xf32>
    %127 = arith.select %57, %125, %126 : vector<1x256xi1>, vector<1x256xf32>
    %128 = arith.addf %116, %127 : vector<1x256xf32>
    %c12 = arith.constant 12 : index
    %c96 = arith.constant 96 : index
    %129 = vector.load %arg7[%c12, %c96] : memref<40x512xf32, #tpu.memory_space<vmem>>, vector<1x256xf32>
    %c17 = arith.constant 17 : index
    %c112_49 = arith.constant 112 : index
    %130 = vector.load %arg7[%c17, %c112_49] : memref<40x512xf32, #tpu.memory_space<vmem>>, vector<1x256xf32>
    %131 = arith.addf %129, %130 : vector<1x256xf32>
    %c22 = arith.constant 22 : index
    %c128_50 = arith.constant 128 : index
    %132 = vector.load %arg7[%c22, %c128_50] : memref<40x512xf32, #tpu.memory_space<vmem>>, vector<1x256xf32>
    %133 = arith.addf %131, %132 : vector<1x256xf32>
    %c27 = arith.constant 27 : index
    %c144_51 = arith.constant 144 : index
    %134 = vector.load %arg7[%c27, %c144_51] : memref<40x512xf32, #tpu.memory_space<vmem>>, vector<1x256xf32>
    %135 = arith.addf %133, %134 : vector<1x256xf32>
    %c32 = arith.constant 32 : index
    %c160 = arith.constant 160 : index
    %136 = vector.load %arg7[%c32, %c160] : memref<40x512xf32, #tpu.memory_space<vmem>>, vector<1x256xf32>
    %137 = arith.addf %135, %136 : vector<1x256xf32>
    %138 = arith.addf %128, %137 : vector<1x256xf32>
    %c13 = arith.constant 13 : index
    %c97 = arith.constant 97 : index
    %139 = vector.load %arg7[%c13, %c97] : memref<40x512xf32, #tpu.memory_space<vmem>>, vector<1x256xf32>
    %c18 = arith.constant 18 : index
    %c113_52 = arith.constant 113 : index
    %140 = vector.load %arg7[%c18, %c113_52] : memref<40x512xf32, #tpu.memory_space<vmem>>, vector<1x256xf32>
    %141 = arith.addf %139, %140 : vector<1x256xf32>
    %c23 = arith.constant 23 : index
    %c129_53 = arith.constant 129 : index
    %142 = vector.load %arg7[%c23, %c129_53] : memref<40x512xf32, #tpu.memory_space<vmem>>, vector<1x256xf32>
    %143 = arith.addf %141, %142 : vector<1x256xf32>
    %c28 = arith.constant 28 : index
    %c145_54 = arith.constant 145 : index
    %144 = vector.load %arg7[%c28, %c145_54] : memref<40x512xf32, #tpu.memory_space<vmem>>, vector<1x256xf32>
    %145 = arith.addf %143, %144 : vector<1x256xf32>
    %c33 = arith.constant 33 : index
    %c161 = arith.constant 161 : index
    %146 = vector.load %arg7[%c33, %c161] : memref<40x512xf32, #tpu.memory_space<vmem>>, vector<1x256xf32>
    %147 = arith.addf %145, %146 : vector<1x256xf32>
    %cst_55 = arith.constant 0.000000e+00 : f32
    %148 = vector.broadcast %cst_55 : f32 to vector<1x256xf32>
    %149 = arith.select %66, %147, %148 : vector<1x256xi1>, vector<1x256xf32>
    %150 = arith.addf %138, %149 : vector<1x256xf32>
    %c14 = arith.constant 14 : index
    %c98 = arith.constant 98 : index
    %151 = vector.load %arg7[%c14, %c98] : memref<40x512xf32, #tpu.memory_space<vmem>>, vector<1x256xf32>
    %c19 = arith.constant 19 : index
    %c114 = arith.constant 114 : index
    %152 = vector.load %arg7[%c19, %c114] : memref<40x512xf32, #tpu.memory_space<vmem>>, vector<1x256xf32>
    %153 = arith.addf %151, %152 : vector<1x256xf32>
    %c24 = arith.constant 24 : index
    %c130 = arith.constant 130 : index
    %154 = vector.load %arg7[%c24, %c130] : memref<40x512xf32, #tpu.memory_space<vmem>>, vector<1x256xf32>
    %155 = arith.addf %153, %154 : vector<1x256xf32>
    %c29 = arith.constant 29 : index
    %c146 = arith.constant 146 : index
    %156 = vector.load %arg7[%c29, %c146] : memref<40x512xf32, #tpu.memory_space<vmem>>, vector<1x256xf32>
    %157 = arith.addf %155, %156 : vector<1x256xf32>
    %c34 = arith.constant 34 : index
    %c162 = arith.constant 162 : index
    %158 = vector.load %arg7[%c34, %c162] : memref<40x512xf32, #tpu.memory_space<vmem>>, vector<1x256xf32>
    %159 = arith.addf %157, %158 : vector<1x256xf32>
    %cst_56 = arith.constant 0.000000e+00 : f32
    %160 = vector.broadcast %cst_56 : f32 to vector<1x256xf32>
    %161 = arith.select %75, %159, %160 : vector<1x256xi1>, vector<1x256xf32>
    %162 = arith.addf %150, %161 : vector<1x256xf32>
    %163 = vector.broadcast %18 : f32 to vector<1x256xf32>
    %164 = arith.addf %162, %163 : vector<1x256xf32>
    %cst_57 = arith.constant 0.000000e+00 : f32
    %165 = vector.broadcast %cst_57 : f32 to vector<1x256xf32>
    %166 = arith.maximumf %164, %165 : vector<1x256xf32>
    %167 = vector.broadcast %19 : f32 to vector<1x256xf32>
    %168 = arith.mulf %167, %80 : vector<1x256xf32>
    %169 = vector.broadcast %20 : f32 to vector<1x256xf32>
    %170 = arith.mulf %169, %105 : vector<1x256xf32>
    %171 = arith.addf %168, %170 : vector<1x256xf32>
    %172 = vector.broadcast %21 : f32 to vector<1x256xf32>
    %173 = arith.mulf %172, %166 : vector<1x256xf32>
    %174 = arith.addf %171, %173 : vector<1x256xf32>
    %175 = vector.broadcast %22 : f32 to vector<1x256xf32>
    %176 = arith.addf %174, %175 : vector<1x256xf32>
    %177 = arith.negf %176 : vector<1x256xf32>
    %178 = math.exp %177 : vector<1x256xf32>
    %cst_58 = arith.constant 1.000000e+00 : f32
    %179 = vector.broadcast %cst_58 : f32 to vector<1x256xf32>
    %180 = arith.addf %179, %178 : vector<1x256xf32>
    %181 = arith.divf %179, %180 : vector<1x256xf32>
    %cst_59 = arith.constant 1.000000e+00 : f32
    %182 = vector.broadcast %cst_59 : f32 to vector<1x256xf32>
    %183 = arith.subf %182, %181 : vector<1x256xf32>
    %184 = vector.broadcast %183 : vector<1x256xf32> to vector<64x256xf32>
    %185 = arith.mulf %1, %184 : vector<64x256xf32>
    %c0_60 = arith.constant 0 : index
    %c0_61 = arith.constant 0 : index
    %c0_62 = arith.constant 0 : index
    %186 = vector.load %arg6[%c0_60, %c0_61, %c0_62] : memref<1x64x256xf32, #tpu.memory_space<vmem>>, vector<1x64x256xf32>
    %187 = vector.shape_cast %186 : vector<1x64x256xf32> to vector<64x256xf32>
    %188 = vector.shape_cast %185 : vector<64x256xf32> to vector<1x64x256xf32>
    tpu.vector_store %arg6[%c0_60, %c0_61, %c0_62], %188 {strides = array<i32>} : memref<1x64x256xf32, #tpu.memory_space<vmem>>, vector<1x64x256xf32>,
    return
  }
  func.func @transform_0(%arg0: i32) -> (i32, i32, i32) {
    %c0_i32 = arith.constant 0 : i32
    %c0_i32_0 = arith.constant 0 : i32
    %c0_i32_1 = arith.constant 0 : i32
    return %arg0, %c0_i32, %c0_i32_0 : i32, i32, i32
  }
  func.func @transform_1(%arg0: i32) -> (i32, i32) {
    %c0_i32 = arith.constant 0 : i32
    %c0_i32_0 = arith.constant 0 : i32
    %c0_i32_1 = arith.constant 0 : i32
    return %c0_i32, %c0_i32_0 : i32, i32
  }
  func.func @transform_2(%arg0: i32) -> (i32, i32) {
    %c0_i32 = arith.constant 0 : i32
    %c0_i32_0 = arith.constant 0 : i32
    %c0_i32_1 = arith.constant 0 : i32
    return %c0_i32, %c0_i32_0 : i32, i32
  }
  func.func @transform_3(%arg0: i32) -> (i32, i32) {
    %c0_i32 = arith.constant 0 : i32
    %c0_i32_0 = arith.constant 0 : i32
    %c0_i32_1 = arith.constant 0 : i32
    return %c0_i32, %c0_i32_0 : i32, i32
  }
  func.func @transform_4(%arg0: i32) -> i32 {
    %c0_i32 = arith.constant 0 : i32
    %c0_i32_0 = arith.constant 0 : i32
    return %c0_i32 : i32
  }
  func.func @transform_5(%arg0: i32) -> (i32, i32, i32) {
    %c0_i32 = arith.constant 0 : i32
    %c0_i32_0 = arith.constant 0 : i32
    %c0_i32_1 = arith.constant 0 : i32
    return %arg0, %c0_i32, %c0_i32_0 : i32, i32, i32
  }
}

</mosaic_0001>

<llo_original>
// kernel: mmca_forward.1
$region0: #{mmca_forward.1}
  #allocation0 [shape = 'u32[]', space=smem, size = 0x4, offset = 0x4, fixed_abs, tag = 'smem constant byte address 0x4 - core index']
  #allocation1 [shape = 'u32[72,128]{1,0:T(1,128)}', space=vmem, size = 0x9000, scoped, tag = 'internal scratch']
  #allocation2 [shape = 'f32[40,512]{1,0:T(8,128)}', space=vmem, size = 0x14000, scoped, tag = 'scratch operand']
  %s0 = inlined_call_operand.vmem [shape: f32[2,64,256], index: 0, kind: input, shape index: {}]
  %s1 = inlined_call_operand.vmem [shape: f32[4,64], index: 1, kind: input, shape index: {}]
  %s2 = inlined_call_operand.vmem [shape: f32[4,1], index: 2, kind: input, shape index: {}]
  %s3 = inlined_call_operand.vmem [shape: f32[40,4], index: 3, kind: input, shape index: {}]
  %s4 = inlined_call_operand.vmem [shape: f32[8], index: 4, kind: input, shape index: {}]
  %s5 = inlined_call_operand.vmem [shape: f32[2,64,256], index: 5, kind: output, shape index: {}]
  %s6 = sld [smem:[#allocation0]]
  $region57: #{mmca_forward.1} parent=0
    _
  %s8 = ssub.s32 1, %s6
  %s9 = scalar_select 0, %s8, %s6
  $region1: #{mmca_forward.1} parent=0
    #allocation3 [shape = 'u8[512]{0}', space=smem, size = 0x200, scoped, tag = 'input window, operand 4, single buffered']
    #allocation4 [shape = 's32[2]{0}', space=sflag, size = 0x8, scoped, tag = 'scoped memory for mmca_forward.1']
    %10 = vsyncpa [#allocation4], 0
    loop: start=0, step=1, limit=4
    $region2: #{mmca_forward.1} parent=1 // loop_pre_header
      _
    $region3: #{mmca_forward.1} parent=1 // loop_header
      %s12 = sphi 0, %s16
      %p13 = scmp.ge.s32.totalorder %s12, 4
      %s22 = sphi 0, %s24
      %s25 = sphi 0, %s22
      %s26 = sphi 0, %s25
      %s42 = sphi 0, %s26
      %s46 = sphi 0, %s46
      %s48 = sphi 0, %s46
      %s49 = sphi 0, %s48
      %s63 = sphi 0, %s49
      %s67 = sphi 0, %s67
      %s69 = sphi 0, %s67
      %s70 = sphi 0, %s69
      %s84 = sphi 0, %s70
      %s88 = sphi 0, %s88
      %s90 = sphi 0, %s88
      %s91 = sphi 0, %s90
      %s105 = sphi 0, %s91
      %s109 = sphi 0, %s109
      %s111 = sphi 0, %s109
      %s112 = sphi 0, %s111
      %s126 = sphi 0, %s112
      %s132 = sphi 0, %s134
      %s135 = sphi 0, %s132
      %s136 = sphi 0, %s135
      %s152 = sphi 0, %s136
    $region4: #{mmca_forward.1} parent=1 // loop_header_branch
      %15 = sbr.rel (%p13) target = $region8
    $region5: #{mmca_forward.1} parent=1 // loop_body
      %s17 = ssub.s32 %s12, 1
      %s18 = ssub.s32 %s12, 2
      %s19 = sadd.s32 %s12, 1
      %s20 = ssub.s32 %s12, %s19
      %p21 = scmp.eq.s32.totalorder %s20, 0
      %s23 = sadd.s32 %s22, 1
      %s24 = scalar_select %p21, %s22, %s23
      %p27 = pneg %p21
      %p28 = scmp.eq.s32.totalorder %s12, 1
      %p29 = por %p27, %p28
      %p30 = scmp.ne.s32.totalorder %s22, %s25
      %p31 = scmp.eq.s32.totalorder %s12, 0
      %p32 = por %p30, %p31
      %p33 = scmp.ne.s32.totalorder %s22, %s25
      %p34 = scmp.eq.s32.totalorder %s17, 1
      %p35 = por %p33, %p34
      %p36 = scmp.ne.s32.totalorder %s25, %s26
      %p37 = scmp.eq.s32.totalorder %s17, 0
      %p38 = por %p36, %p37
      %p39 = scmp.ne.s32.totalorder %s25, %s26
      %p40 = scmp.eq.s32.totalorder %s18, 1
      %p41 = por %p39, %p40
      %p43 = scmp.ne.s32.totalorder %s26, %s42
      %p44 = scmp.eq.s32.totalorder %s18, 0
      %p45 = por %p43, %p44
      %s47 = sadd.s32 %s46, 1
      %p50 = scmp.eq.s32.totalorder %s12, 1
      %p51 = scmp.ne.s32.totalorder %s46, %s48
      %p52 = scmp.eq.s32.totalorder %s12, 0
      %p53 = por %p51, %p52
      %p54 = scmp.ne.s32.totalorder %s46, %s48
      %p55 = scmp.eq.s32.totalorder %s17, 1
      %p56 = por %p54, %p55
      %p57 = scmp.ne.s32.totalorder %s48, %s49
      %p58 = scmp.eq.s32.totalorder %s17, 0
      %p59 = por %p57, %p58
      %p60 = scmp.ne.s32.totalorder %s48, %s49
      %p61 = scmp.eq.s32.totalorder %s18, 1
      %p62 = por %p60, %p61
      %p64 = scmp.ne.s32.totalorder %s49, %s63
      %p65 = scmp.eq.s32.totalorder %s18, 0
      %p66 = por %p64, %p65
      %s68 = sadd.s32 %s67, 1
      %p71 = scmp.eq.s32.totalorder %s12, 1
      %p72 = scmp.ne.s32.totalorder %s67, %s69
      %p73 = scmp.eq.s32.totalorder %s12, 0
      %p74 = por %p72, %p73
      %p75 = scmp.ne.s32.totalorder %s67, %s69
      %p76 = scmp.eq.s32.totalorder %s17, 1
      %p77 = por %p75, %p76
      %p78 = scmp.ne.s32.totalorder %s69, %s70
      %p79 = scmp.eq.s32.totalorder %s17, 0
      %p80 = por %p78, %p79
      %p81 = scmp.ne.s32.totalorder %s69, %s70
      %p82 = scmp.eq.s32.totalorder %s18, 1
      %p83 = por %p81, %p82
      %p85 = scmp.ne.s32.totalorder %s70, %s84
      %p86 = scmp.eq.s32.totalorder %s18, 0
      %p87 = por %p85, %p86
      %s89 = sadd.s32 %s88, 1
      %p92 = scmp.eq.s32.totalorder %s12, 1
      %p93 = scmp.ne.s32.totalorder %s88, %s90
      %p94 = scmp.eq.s32.totalorder %s12, 0
      %p95 = por %p93, %p94
      %p96 = scmp.ne.s32.totalorder %s88, %s90
      %p97 = scmp.eq.s32.totalorder %s17, 1
      %p98 = por %p96, %p97
      %p99 = scmp.ne.s32.totalorder %s90, %s91
      %p100 = scmp.eq.s32.totalorder %s17, 0
      %p101 = por %p99, %p100
      %p102 = scmp.ne.s32.totalorder %s90, %s91
      %p103 = scmp.eq.s32.totalorder %s18, 1
      %p104 = por %p102, %p103
      %p106 = scmp.ne.s32.totalorder %s91, %s105
      %p107 = scmp.eq.s32.totalorder %s18, 0
      %p108 = por %p106, %p107
      %s110 = sadd.s32 %s109, 1
      %p113 = scmp.eq.s32.totalorder %s12, 1
      %p114 = scmp.ne.s32.totalorder %s109, %s111
      %p115 = scmp.eq.s32.totalorder %s12, 0
      %p116 = por %p114, %p115
      %p117 = scmp.ne.s32.totalorder %s109, %s111
      %p118 = scmp.eq.s32.totalorder %s17, 1
      %p119 = por %p117, %p118
      %p120 = scmp.ne.s32.totalorder %s111, %s112
      %p121 = scmp.eq.s32.totalorder %s17, 0
      %p122 = por %p120, %p121
      %p123 = scmp.ne.s32.totalorder %s111, %s112
      %p124 = scmp.eq.s32.totalorder %s18, 1
      %p125 = por %p123, %p124
      %p127 = scmp.ne.s32.totalorder %s112, %s126
      %p128 = scmp.eq.s32.totalorder %s18, 0
      %p129 = por %p127, %p128
      %s130 = ssub.s32 %s12, %s19
      %p131 = scmp.eq.s32.totalorder %s130, 0
      %s133 = sadd.s32 %s132, 1
      %s134 = scalar_select %p131, %s132, %s133
      %p137 = pneg %p131
      %p138 = scmp.eq.s32.totalorder %s12, 1
      %p139 = por %p137, %p138
      %p140 = scmp.ne.s32.totalorder %s132, %s135
      %p141 = scmp.eq.s32.totalorder %s12, 0
      %p142 = por %p140, %p141
      %p143 = scmp.ne.s32.totalorder %s132, %s135
      %p144 = scmp.eq.s32.totalorder %s17, 1
      %p145 = por %p143, %p144
      %p146 = scmp.ne.s32.totalorder %s135, %s136
      %p147 = scmp.eq.s32.totalorder %s17, 0
      %p148 = por %p146, %p147
      %p149 = scmp.ne.s32.totalorder %s135, %s136
      %p150 = scmp.eq.s32.totalorder %s18, 1
      %p151 = por %p149, %p150
      %p153 = scmp.ne.s32.totalorder %s136, %s152
      %p154 = scmp.eq.s32.totalorder %s18, 0
      %p155 = por %p153, %p154
      %p156 = scmp.le.s32.totalorder 1, %s12
      %p157 = scmp.lt.s32.totalorder %s12, 3
      %p158 = pnand %p156, %p157
      %p159 = pneg %p158
      // Predicated region
      $region9: #{mmca_forward.1} parent=5 // pred_check
        _
      $region10: #{mmca_forward.1} parent=5 // pred_check_branch
        %161 = sbr.rel (%p158) target = $region12
      $region11: #{mmca_forward.1} parent=5 // pred_region
        %s162 = ssub.s32 %s12, 1
        // Predicated region
        $region13: #{mmca_forward.1} parent=11 // pred_check
          %p163 = pneg %p59
        $region14: #{mmca_forward.1} parent=11 // pred_check_branch
          %165 = sbr.rel (%p163) target = $region16
        $region15: #{mmca_forward.1} parent=11 // pred_region
          _
        $region16: #{mmca_forward.1} parent=11 // pred_fallthru
          _
        // Predicated region
        $region17: #{mmca_forward.1} parent=11 // pred_check
          %p166 = pneg %p80
        $region18: #{mmca_forward.1} parent=11 // pred_check_branch
          %168 = sbr.rel (%p166) target = $region20
        $region19: #{mmca_forward.1} parent=11 // pred_region
          _
        $region20: #{mmca_forward.1} parent=11 // pred_fallthru
          _
        // Predicated region
        $region21: #{mmca_forward.1} parent=11 // pred_check
          %p169 = pneg %p101
        $region22: #{mmca_forward.1} parent=11 // pred_check_branch
          %171 = sbr.rel (%p169) target = $region24
        $region23: #{mmca_forward.1} parent=11 // pred_region
          _
        $region24: #{mmca_forward.1} parent=11 // pred_fallthru
          _
        // Predicated region
        $region25: #{mmca_forward.1} parent=11 // pred_check
          %p172 = pneg %p122
        $region26: #{mmca_forward.1} parent=11 // pred_check_branch
          %174 = sbr.rel (%p172) target = $region28
        $region27: #{mmca_forward.1} parent=11 // pred_region
          %176 = vsyncadd [#allocation4], 0
          %s178 = sshll.u32 %s4, 4
          %s179 = int_to_ptr.vmem [resolvable:$true] %s178
          %181 = dma.vmem_to_smem %s179, 16, [#allocation3], [#allocation4]
        $region28: #{mmca_forward.1} parent=11 // pred_fallthru
          _
      $region12: #{mmca_forward.1} parent=5 // pred_fallthru
        _
      %p182 = scmp.lt.s32.totalorder %s12, 2
      // Predicated region
      $region29: #{mmca_forward.1} parent=5 // pred_check
        %p183 = pneg %p182
      $region30: #{mmca_forward.1} parent=5 // pred_check_branch
        %185 = sbr.rel (%p183) target = $region32
      $region31: #{mmca_forward.1} parent=5 // pred_region
        // Predicated region
        $region33: #{mmca_forward.1} parent=31 // pred_check
          %p186 = pneg %p32
        $region34: #{mmca_forward.1} parent=31 // pred_check_branch
          %188 = sbr.rel (%p186) target = $region36
        $region35: #{mmca_forward.1} parent=31 // pred_region
          %p189 = scmp.lt.s32.totalorder %s12, 1
          %s190 = scalar_select %p189, %s12, 1
          %s191 = smul.addr %s190, 16
          %s192 = smul.addr %s191, 8
          %s193 = scalar_lea.vmem %s0, %s192
        $region36: #{mmca_forward.1} parent=31 // pred_fallthru
          _
      $region32: #{mmca_forward.1} parent=5 // pred_fallthru
        _
      %p194 = scmp.le.s32.totalorder 1, %s12
      %p195 = scmp.lt.s32.totalorder %s12, 3
      %p196 = pnand %p194, %p195
      %p197 = pneg %p196
      // Predicated region
      $region37: #{mmca_forward.1} parent=5 // pred_check
        _
      $region38: #{mmca_forward.1} parent=5 // pred_check_branch
        %199 = sbr.rel (%p196) target = $region40
      $region39: #{mmca_forward.1} parent=5 // pred_region
        %s200 = ssub.s32 %s12, 1
        // Predicated region
        $region41: #{mmca_forward.1} parent=39 // pred_check
          %p201 = pneg %p122
        $region42: #{mmca_forward.1} parent=39 // pred_check_branch
          %203 = sbr.rel (%p201) target = $region44
        $region43: #{mmca_forward.1} parent=39 // pred_region
          %205 = dma.done [#allocation4], 16
        $region44: #{mmca_forward.1} parent=39 // pred_fallthru
          _
        %206 = sfence
        %p207 = scmp.lt.s32.totalorder %s17, 1
        %s208 = scalar_select %p207, %s17, 1
        %s209 = smul.addr %s208, 16
        %s210 = smul.addr %s209, 8
        %s211 = scalar_lea.vmem %s0, %s210
        %p212 = pneg %p38
        %p213 = pneg %p35
        %p214 = pneg %p59
        %p215 = pneg %p56
        %p216 = pneg %p80
        %p217 = pneg %p77
        %p218 = pneg %p101
        %p219 = pneg %p98
        %p220 = pneg %p122
        %p221 = pneg %p119
        %p222 = pneg %p148
        %p223 = pneg %p145
        %p224 = scmp.lt.s32.totalorder %s17, 1
        %s225 = scalar_select %p224, %s17, 1
        %s226 = smul.addr %s225, 16
        %s227 = smul.addr %s226, 8
        %s228 = scalar_lea.vmem %s5, %s227
        %p229 = scmp.lt.s32.totalorder %s17, 1
        %s230 = scalar_select %p229, %s17, 1
        %s231 = smul.addr %s230, 16
        %s232 = smul.addr %s231, 8
        %s233 = scalar_lea.vmem %s0, %s232
        %p234 = scmp.lt.s32.totalorder %s17, 1
        %s235 = scalar_select %p234, %s17, 1
        %s236 = smul.addr %s235, 16
        %s237 = smul.addr %s236, 8
        %s238 = scalar_lea.vmem %s5, %s237
        %v239 = vld [vmem:[%s233] sm:$0xff]
        %v240 = vld [vmem:[%s233 + $0x8] sm:$0xff]
        %v241 = vld [vmem:[%s233 + $0x10] sm:$0xff]
        %v242 = vld [vmem:[%s233 + $0x18] sm:$0xff]
        %v243 = vld [vmem:[%s233 + $0x20] sm:$0xff]
        %v244 = vld [vmem:[%s233 + $0x28] sm:$0xff]
        %v245 = vld [vmem:[%s233 + $0x30] sm:$0xff]
        %v246 = vld [vmem:[%s233 + $0x38] sm:$0xff]
        %v247 = vld [vmem:[%s233 + $0x40] sm:$0xff]
        %v248 = vld [vmem:[%s233 + $0x48] sm:$0xff]
        %v249 = vld [vmem:[%s233 + $0x50] sm:$0xff]
        %v250 = vld [vmem:[%s233 + $0x58] sm:$0xff]
        %v251 = vld [vmem:[%s233 + $0x60] sm:$0xff]
        %v252 = vld [vmem:[%s233 + $0x68] sm:$0xff]
        %v253 = vld [vmem:[%s233 + $0x70] sm:$0xff]
        %v254 = vld [vmem:[%s233 + $0x78] sm:$0xff]
        %v255 = vld [vmem:[%s1] sm:$0xf]
        %v256 = vld [vmem:[%s2] sm:$0xf]
        %258 = vset.pattern.permute.xlu0 0
        %259 = vperm.xlu0 %258, %v256
        %v260 = vpop.permute.xlu0 %259
        %vm262 = vcmask 523264
        %v264 = vsel %vm262, %v255, 0
        %266 = vmatpush.msra.mxu0 0.0
        %267 = vmatpush.msra.mxu0 0.0
        %268 = vmatpush.msra.mxu0 0.0
        %269 = vmatpush.msra.mxu0 0.0
        %270 = vmatpush.msra.mxu0 0.0
        %271 = vmatpush.msra.mxu0 0.0
        %272 = vmatpush.msra.mxu0 0.0
        %273 = vmatpush.msra.mxu0 0.0
        %274 = vmatpush.msra.mxu0 %v253
        %275 = vmatpush.msra.mxu0 %v251
        %276 = vmatpush.msra.mxu0 %v249
        %277 = vmatpush.msra.mxu0 %v247
        %278 = vmatpush.msra.mxu0 %v245
        %279 = vmatpush.msra.mxu0 %v243
        %280 = vmatpush.msra.mxu0 %v241
        %281 = vmatpush.msra.mxu0 %v239
        %282 = vmatmul.f32.gmra.mxu0 %v264
        %v283 = vpop.f32.mrf.mxu0
        %v284 = vadd.f32 %v260, %v283
        %285 = vdwg.mxu0
        %286 = vmatpush.msra.mxu0 0.0
        %287 = vmatpush.msra.mxu0 0.0
        %288 = vmatpush.msra.mxu0 0.0
        %289 = vmatpush.msra.mxu0 0.0
        %290 = vmatpush.msra.mxu0 0.0
        %291 = vmatpush.msra.mxu0 0.0
        %292 = vmatpush.msra.mxu0 0.0
        %293 = vmatpush.msra.mxu0 0.0
        %294 = vmatpush.msra.mxu0 %v254
        %295 = vmatpush.msra.mxu0 %v252
        %296 = vmatpush.msra.mxu0 %v250
        %297 = vmatpush.msra.mxu0 %v248
        %298 = vmatpush.msra.mxu0 %v246
        %299 = vmatpush.msra.mxu0 %v244
        %300 = vmatpush.msra.mxu0 %v242
        %301 = vmatpush.msra.mxu0 %v240
        %302 = vmatmul.f32.gmra.mxu0 %v264
        %v303 = vpop.f32.mrf.mxu0
        %v304 = vadd.f32 %v260, %v303
        %305 = vdwg.mxu0
        %v306 = vmax.f32 %v284, 0.0
        %v307 = vmax.f32 %v304, 0.0
        %v308 = vld [vmem:[%s3] sm:$0xff]
        %v309 = vld [vmem:[%s3 + $0x8] sm:$0xff]
        %v310 = vld [vmem:[%s3 + $0x10] sm:$0xff]
        %v311 = vld [vmem:[%s3 + $0x18] sm:$0xff]
        %v312 = vld [vmem:[%s3 + $0x20] sm:$0xff]
        %vm313 = vcmask 31744
        %v315 = vsel %vm313, %v308, 0
        %v318 = vsel %vm313, %v309, 0
        %v321 = vsel %vm313, %v310, 0
        %v324 = vsel %vm313, %v311, 0
        %v327 = vsel %vm313, %v312, 0
        %vm329 = vcmask 1043456
        %v331 = vsel %vm329, %v306, 0
        %v334 = vsel %vm329, %v307, 0
        %336 = vmatpush.msra.mxu0 0.0
        %337 = vmatpush.msra.mxu0 0.0
        %338 = vmatpush.msra.mxu0 0.0
        %339 = vmatpush.msra.mxu0 0.0
        %340 = vmatpush.msra.mxu0 0.0
        %341 = vmatpush.msra.mxu0 0.0
        %342 = vmatpush.msra.mxu0 0.0
        %343 = vmatpush.msra.mxu0 0.0
        %344 = vmatpush.msra.mxu0 0.0
        %345 = vmatpush.msra.mxu0 0.0
        %346 = vmatpush.msra.mxu0 0.0
        %347 = vmatpush.msra.mxu0 0.0
        %348 = vmatpush.msra.mxu0 0.0
        %349 = vmatpush.msra.mxu0 0.0
        %350 = vmatpush.msra.mxu0 0.0
        %351 = vmatpush.msra.mxu0 %v331
        %352 = vmatmul.f32.gmra.mxu0 %v315
        %v353 = vpop.f32.mrf.mxu0
        %v354 = vadd.f32 0.0, %v353
        %355 = vmatmul.f32.gmra.mxu0 %v318
        %v356 = vpop.f32.mrf.mxu0
        %v357 = vadd.f32 0.0, %v356
        %358 = vmatmul.f32.gmra.mxu0 %v321
        %v359 = vpop.f32.mrf.mxu0
        %v360 = vadd.f32 0.0, %v359
        %361 = vmatmul.f32.gmra.mxu0 %v324
        %v362 = vpop.f32.mrf.mxu0
        %v363 = vadd.f32 0.0, %v362
        %364 = vmatmul.f32.gmra.mxu0 %v327
        %v365 = vpop.f32.mrf.mxu0
        %v366 = vadd.f32 0.0, %v365
        %367 = vdwg.mxu0
        %368 = vmatpush.msra.mxu0 0.0
        %369 = vmatpush.msra.mxu0 0.0
        %370 = vmatpush.msra.mxu0 0.0
        %371 = vmatpush.msra.mxu0 0.0
        %372 = vmatpush.msra.mxu0 0.0
        %373 = vmatpush.msra.mxu0 0.0
        %374 = vmatpush.msra.mxu0 0.0
        %375 = vmatpush.msra.mxu0 0.0
        %376 = vmatpush.msra.mxu0 0.0
        %377 = vmatpush.msra.mxu0 0.0
        %378 = vmatpush.msra.mxu0 0.0
        %379 = vmatpush.msra.mxu0 0.0
        %380 = vmatpush.msra.mxu0 0.0
        %381 = vmatpush.msra.mxu0 0.0
        %382 = vmatpush.msra.mxu0 0.0
        %383 = vmatpush.msra.mxu0 %v334
        %384 = vmatmul.f32.gmra.mxu0 %v315
        %v385 = vpop.f32.mrf.mxu0
        %v386 = vadd.f32 0.0, %v385
        %387 = vmatmul.f32.gmra.mxu0 %v318
        %v388 = vpop.f32.mrf.mxu0
        %v389 = vadd.f32 0.0, %v388
        %390 = vmatmul.f32.gmra.mxu0 %v321
        %v391 = vpop.f32.mrf.mxu0
        %v392 = vadd.f32 0.0, %v391
        %393 = vmatmul.f32.gmra.mxu0 %v324
        %v394 = vpop.f32.mrf.mxu0
        %v395 = vadd.f32 0.0, %v394
        %396 = vmatmul.f32.gmra.mxu0 %v327
        %v397 = vpop.f32.mrf.mxu0
        %v398 = vadd.f32 0.0, %v397
        %399 = vdwg.mxu0
        %400 = vst [vmem:[#allocation2] sm:$0xff] 0.0
        %401 = vst [vmem:[#allocation2 + $0x20] sm:$0xff] 0.0
        %402 = vst [vmem:[#allocation2 + $0x40] sm:$0xff] 0.0
        %403 = vst [vmem:[#allocation2 + $0x60] sm:$0xff] 0.0
        %404 = vst [vmem:[#allocation2 + $0x80] sm:$0xff] 0.0
        %405 = vst [vmem:[#allocation2 + $0x18] sm:$0xff] 0.0
        %406 = vst [vmem:[#allocation2 + $0x38] sm:$0xff] 0.0
        %407 = vst [vmem:[#allocation2 + $0x58] sm:$0xff] 0.0
        %408 = vst [vmem:[#allocation2 + $0x78] sm:$0xff] 0.0
        %409 = vst [vmem:[#allocation2 + $0x98] sm:$0xff] 0.0
        %410 = vst [vmem:[#allocation2 + $0x8] sm:$0xff] %v354
        %411 = vst [vmem:[#allocation2 + $0x10] sm:$0xff] %v386
        %412 = vst [vmem:[#allocation2 + $0x28] sm:$0xff] %v357
        %413 = vst [vmem:[#allocation2 + $0x30] sm:$0xff] %v389
        %414 = vst [vmem:[#allocation2 + $0x48] sm:$0xff] %v360
        %415 = vst [vmem:[#allocation2 + $0x50] sm:$0xff] %v392
        %416 = vst [vmem:[#allocation2 + $0x68] sm:$0xff] %v363
        %417 = vst [vmem:[#allocation2 + $0x70] sm:$0xff] %v395
        %418 = vst [vmem:[#allocation2 + $0x88] sm:$0xff] %v366
        %419 = vst [vmem:[#allocation2 + $0x90] sm:$0xff] %v398
        %s420 = sld [smem:[#allocation3]]
        %s421 = sld [smem:[#allocation3 + $0x1]]
        %s422 = sld [smem:[#allocation3 + $0x2]]
        %s423 = sld [smem:[#allocation3 + $0x3]]
        %s424 = sld [smem:[#allocation3 + $0x4]]
        %s425 = sld [smem:[#allocation3 + $0x5]]
        %s426 = sld [smem:[#allocation3 + $0x6]]
        %v427 = vlaneseq
        %v428 = vand.u32 %v427, 127
        %v429 = vadd.s32 %v428, 128
        %vm430 = vcmp.lt.s32.totalorder %v428, 0
        %v431 = vsub.s32 0, %v428
        %v432 = vsel %vm430, %v431, %v428
        %v433 = vshrl.u32 %v432, 4
        %v434 = vand.u32 %v432, 15
        %v435 = vsub.s32 0, %v434
        %v436 = vsel %vm430, %v435, %v434
        %vm437 = vcmp.lt.s32.totalorder %v429, 0
        %v438 = vsub.s32 0, %v429
        %v439 = vsel %vm437, %v438, %v429
        %v440 = vshrl.u32 %v439, 4
        %v441 = vand.u32 %v439, 15
        %v442 = vsub.s32 0, %v441
        %v443 = vsel %vm437, %v442, %v441
        %vm444 = vcmp.ne.s32.totalorder %v436, 0
        %vm445 = vcmp.ne.s32.totalorder %v443, 0
        %vm446 = vcmp.lt.s32.totalorder %v436, 0
        %vm447 = vcmp.lt.s32.totalorder %v443, 0
        %vm448 = vmand %vm446, %vm444
        %vm449 = vmand %vm447, %vm445
        %v450 = vadd.s32 %v436, 16
        %v451 = vadd.s32 %v443, 16
        %v452 = vsel %vm448, %v450, %v436
        %v453 = vsel %vm449, %v451, %v443
        %v454 = vadd.s32 %v452, 4294967294
        %v455 = vadd.s32 %v453, 4294967294
        %vm456 = vcmp.ge.s32.totalorder %v454, 0
        %vm457 = vcmp.ge.s32.totalorder %v455, 0
        %vm458 = vcmp.lt.s32.totalorder %v454, 16
        %vm459 = vcmp.lt.s32.totalorder %v455, 16
        %vm460 = vmand %vm456, %vm458
        %vm461 = vmand %vm457, %vm459
        %v462 = vadd.s32 %v452, 4294967295
        %v463 = vadd.s32 %v453, 4294967295
        %vm464 = vcmp.ge.s32.totalorder %v462, 0
        %vm465 = vcmp.ge.s32.totalorder %v463, 0
        %vm466 = vcmp.lt.s32.totalorder %v462, 16
        %vm467 = vcmp.lt.s32.totalorder %v463, 16
        %vm468 = vmand %vm464, %vm466
        %vm469 = vmand %vm465, %vm467
        %v470 = vadd.s32 %v452, 1
        %v471 = vadd.s32 %v453, 1
        %vm472 = vcmp.ge.s32.totalorder %v470, 0
        %vm473 = vcmp.ge.s32.totalorder %v471, 0
        %vm474 = vcmp.lt.s32.totalorder %v470, 16
        %vm475 = vcmp.lt.s32.totalorder %v471, 16
        %vm476 = vmand %vm472, %vm474
        %vm477 = vmand %vm473, %vm475
        %v478 = vadd.s32 %v452, 2
        %v479 = vadd.s32 %v453, 2
        %vm480 = vcmp.ge.s32.totalorder %v478, 0
        %vm481 = vcmp.ge.s32.totalorder %v479, 0
        %vm482 = vcmp.lt.s32.totalorder %v478, 16
        %vm483 = vcmp.lt.s32.totalorder %v479, 16
        %vm484 = vmand %vm480, %vm482
        %vm485 = vmand %vm481, %vm483
        %v486 = vstv %s420
        %v487 = vadd.f32 %v354, %v486
        %v488 = vadd.f32 %v386, %v486
        %v489 = vmax.f32 %v487, 0.0
        %v490 = vmax.f32 %v488, 0.0
        %s491 = scalar_lea.vmem [#allocation2], 1
        %v492 = vld [vmem:[%s491] ss:$8 sm:$0x7]
        %s493 = scalar_lea.vmem [#allocation2], 4
        %v494 = vld [vmem:[%s493] ss:$8 sm:$0x7]
        %496 = vrot.lane.b32.xlu0 %v494, 112
        %v497 = vpop.permute.xlu0 %496
        %v498 = vrot.slane %v497, 1
        %vm499 = vcmask 916480
        %v500 = vsel %vm499, %v497, %v498
        %v502 = vadd.f32 %v492, %v500
        %s503 = scalar_lea.vmem [#allocation2], 15
        %v504 = vld [vmem:[%s503] ss:$8 sm:$0x7]
        %506 = vrot.lane.b32.xlu0 %v504, 96
        %v507 = vpop.permute.xlu0 %506
        %v508 = vrot.slane %v507, 7
        %vm509 = vcmask 785408
        %v510 = vsel %vm509, %v508, %v507
        %v512 = vadd.f32 %v502, %v510
        %v514 = vperm.slane %v512, 0
        %v515 = vperm.slane %v512, 1
        %v516 = vperm.slane %v512, 2
        %517 = vrot.lane.b32.xlu0 %v514, 17
        %v518 = vpop.permute.xlu0 %517
        %519 = vrot.lane.b32.xlu0 %v515, 17
        %v520 = vpop.permute.xlu0 %519
        %521 = vrot.lane.b32.xlu0 %v516, 17
        %v522 = vpop.permute.xlu0 %521
        %vm523 = vcmask 138240
        %v524 = vsel %vm523, %v518, %v520
        %v525 = vsel %vm523, %v520, %v522
        %v528 = vsel %vm468, %v524, 0.0
        %v529 = vsel %vm469, %v525, 0.0
        %s530 = scalar_lea.vmem [#allocation2], 2
        %v531 = vld [vmem:[%s530] ss:$8 sm:$0x7]
        %s532 = scalar_lea.vmem [#allocation2], 13
        %v533 = vld [vmem:[%s532] ss:$8 sm:$0x3]
        %535 = vrot.lane.b32.xlu0 %v533, 112
        %v536 = vpop.permute.xlu0 %535
        %v537 = vrot.slane %v536, 7
        %v538 = vsel %vm499, %v537, %v536
        %v540 = vadd.f32 %v531, %v538
        %s541 = scalar_lea.vmem [#allocation2], 40
        %v542 = vld [vmem:[%s541] ss:$8 sm:$0x7]
        %544 = vrot.lane.b32.xlu0 %v542, 96
        %v545 = vpop.permute.xlu0 %544
        %v546 = vrot.slane %v545, 7
        %v547 = vsel %vm509, %v546, %v545
        %v549 = vadd.f32 %v540, %v547
        %v551 = vperm.slane %v549, 0
        %v552 = vperm.slane %v549, 1
        %v553 = vperm.slane %v549, 2
        %554 = vrot.lane.b32.xlu0 %v551, 16
        %v555 = vpop.permute.xlu0 %554
        %556 = vrot.lane.b32.xlu0 %v552, 16
        %v557 = vpop.permute.xlu0 %556
        %558 = vrot.lane.b32.xlu0 %v553, 16
        %v559 = vpop.permute.xlu0 %558
        %vm560 = vcmask 130048
        %v561 = vsel %vm560, %v555, %v557
        %v562 = vsel %vm560, %v557, %v559
        %v565 = vadd.f32 %v528, %v561
        %v566 = vadd.f32 %v529, %v562
        %s567 = scalar_lea.vmem [#allocation2], 3
        %v568 = vld [vmem:[%s567] ss:$8 sm:$0x7]
        %s569 = scalar_lea.vmem [#allocation2], 14
        %v570 = vld [vmem:[%s569] ss:$8 sm:$0x7]
        %572 = vrot.lane.b32.xlu0 %v570, 112
        %v573 = vpop.permute.xlu0 %572
        %v574 = vrot.slane %v573, 7
        %v575 = vsel %vm499, %v574, %v573
        %v577 = vadd.f32 %v568, %v575
        %s578 = scalar_lea.vmem [#allocation2], 41
        %v579 = vld [vmem:[%s578] ss:$8 sm:$0x7]
        %581 = vrot.lane.b32.xlu0 %v579, 96
        %v582 = vpop.permute.xlu0 %581
        %v583 = vrot.slane %v582, 7
        %v584 = vsel %vm509, %v583, %v582
        %v586 = vadd.f32 %v577, %v584
        %v588 = vperm.slane %v586, 0
        %v589 = vperm.slane %v586, 1
        %v590 = vperm.slane %v586, 2
        %591 = vrot.lane.b32.xlu0 %v588, 15
        %v592 = vpop.permute.xlu0 %591
        %593 = vrot.lane.b32.xlu0 %v589, 15
        %v594 = vpop.permute.xlu0 %593
        %595 = vrot.lane.b32.xlu0 %v590, 15
        %v596 = vpop.permute.xlu0 %595
        %vm597 = vcmask 121856
        %v598 = vsel %vm597, %v592, %v594
        %v599 = vsel %vm597, %v594, %v596
        %v602 = vsel %vm476, %v598, 0.0
        %v603 = vsel %vm477, %v599, 0.0
        %v604 = vadd.f32 %v565, %v602
        %v605 = vadd.f32 %v566, %v603
        %v606 = vstv %s421
        %v607 = vadd.f32 %v604, %v606
        %v608 = vadd.f32 %v605, %v606
        %v609 = vmax.f32 %v607, 0.0
        %v610 = vmax.f32 %v608, 0.0
        %s611 = scalar_lea.vmem [#allocation2], 34
        %v612 = vld [vmem:[%s611] ss:$8 sm:$0x7]
        %s613 = scalar_lea.vmem [#allocation2], 39
        %v614 = vld [vmem:[%s613] ss:$8 sm:$0x7]
        %616 = vrot.lane.b32.xlu0 %v614, 112
        %v617 = vpop.permute.xlu0 %616
        %v618 = vrot.slane %v617, 1
        %v619 = vsel %vm499, %v617, %v618
        %v621 = vadd.f32 %v612, %v619
        %s622 = scalar_lea.vmem [#allocation2], 68
        %v623 = vld [vmem:[%s622] ss:$8 sm:$0x7]
        %625 = vrot.lane.b32.xlu0 %v623, 96
        %v626 = vpop.permute.xlu0 %625
        %v627 = vrot.slane %v626, 1
        %v628 = vsel %vm509, %v626, %v627
        %v630 = vadd.f32 %v621, %v628
        %s631 = scalar_lea.vmem [#allocation2], 105
        %v632 = vld [vmem:[%s631] ss:$8 sm:$0x7]
        %634 = vrot.lane.b32.xlu0 %v632, 80
        %v635 = vpop.permute.xlu0 %634
        %v636 = vrot.slane %v635, 7
        %vm637 = vcmask 654336
        %v638 = vsel %vm637, %v636, %v635
        %v640 = vadd.f32 %v630, %v638
        %s641 = scalar_lea.vmem [#allocation2], 110
        %v642 = vld [vmem:[%s641] ss:$8 sm:$0x7]
        %644 = vrot.lane.b32.xlu0 %v642, 64
        %v645 = vpop.permute.xlu0 %644
        %v646 = vrot.slane %v645, 7
        %v647 = vsel %vm262, %v646, %v645
        %v649 = vadd.f32 %v640, %v647
        %v651 = vperm.slane %v649, 0
        %v652 = vperm.slane %v649, 1
        %v653 = vperm.slane %v649, 2
        %654 = vrot.lane.b32.xlu0 %v651, 34
        %v655 = vpop.permute.xlu0 %654
        %656 = vrot.lane.b32.xlu0 %v652, 34
        %v657 = vpop.permute.xlu0 %656
        %658 = vrot.lane.b32.xlu0 %v653, 34
        %v659 = vpop.permute.xlu0 %658
        %vm660 = vcmask 277504
        %v661 = vsel %vm660, %v655, %v657
        %v662 = vsel %vm660, %v657, %v659
        %v665 = vsel %vm460, %v661, 0.0
        %v666 = vsel %vm461, %v662, 0.0
        %s667 = scalar_lea.vmem [#allocation2], 35
        %v668 = vld [vmem:[%s667] ss:$8 sm:$0x7]
        %s669 = scalar_lea.vmem [#allocation2], 64
        %v670 = vld [vmem:[%s669] ss:$8 sm:$0x7]
        %672 = vrot.lane.b32.xlu0 %v670, 112
        %v673 = vpop.permute.xlu0 %672
        %v674 = vrot.slane %v673, 1
        %v675 = vsel %vm499, %v673, %v674
        %v677 = vadd.f32 %v668, %v675
        %s678 = scalar_lea.vmem [#allocation2], 69
        %v679 = vld [vmem:[%s678] ss:$8 sm:$0x7]
        %681 = vrot.lane.b32.xlu0 %v679, 96
        %v682 = vpop.permute.xlu0 %681
        %v683 = vrot.slane %v682, 1
        %v684 = vsel %vm509, %v682, %v683
        %v686 = vadd.f32 %v677, %v684
        %s687 = scalar_lea.vmem [#allocation2], 106
        %v688 = vld [vmem:[%s687] ss:$8 sm:$0x7]
        %690 = vrot.lane.b32.xlu0 %v688, 80
        %v691 = vpop.permute.xlu0 %690
        %v692 = vrot.slane %v691, 7
        %v693 = vsel %vm637, %v692, %v691
        %v695 = vadd.f32 %v686, %v693
        %s696 = scalar_lea.vmem [#allocation2], 111
        %v697 = vld [vmem:[%s696] ss:$8 sm:$0x7]
        %699 = vrot.lane.b32.xlu0 %v697, 64
        %v700 = vpop.permute.xlu0 %699
        %v701 = vrot.slane %v700, 7
        %v702 = vsel %vm262, %v701, %v700
        %v704 = vadd.f32 %v695, %v702
        %v706 = vperm.slane %v704, 0
        %v707 = vperm.slane %v704, 1
        %v708 = vperm.slane %v704, 2
        %709 = vrot.lane.b32.xlu0 %v706, 33
        %v710 = vpop.permute.xlu0 %709
        %711 = vrot.lane.b32.xlu0 %v707, 33
        %v712 = vpop.permute.xlu0 %711
        %713 = vrot.lane.b32.xlu0 %v708, 33
        %v714 = vpop.permute.xlu0 %713
        %vm715 = vcmask 269312
        %v716 = vsel %vm715, %v710, %v712
        %v717 = vsel %vm715, %v712, %v714
        %v720 = vsel %vm468, %v716, 0.0
        %v721 = vsel %vm469, %v717, 0.0
        %v722 = vadd.f32 %v665, %v720
        %v723 = vadd.f32 %v666, %v721
        %s724 = scalar_lea.vmem [#allocation2], 36
        %v725 = vld [vmem:[%s724] ss:$8 sm:$0x7]
        %s726 = scalar_lea.vmem [#allocation2], 65
        %v727 = vld [vmem:[%s726] ss:$8 sm:$0x7]
        %729 = vrot.lane.b32.xlu0 %v727, 112
        %v730 = vpop.permute.xlu0 %729
        %v731 = vrot.slane %v730, 1
        %v732 = vsel %vm499, %v730, %v731
        %v734 = vadd.f32 %v725, %v732
        %s735 = scalar_lea.vmem [#allocation2], 78
        %v736 = vld [vmem:[%s735] ss:$8 sm:$0x3]
        %738 = vrot.lane.b32.xlu0 %v736, 96
        %v739 = vpop.permute.xlu0 %738
        %v740 = vrot.slane %v739, 7
        %v741 = vsel %vm509, %v740, %v739
        %v743 = vadd.f32 %v734, %v741
        %s744 = scalar_lea.vmem [#allocation2], 107
        %v745 = vld [vmem:[%s744] ss:$8 sm:$0x7]
        %747 = vrot.lane.b32.xlu0 %v745, 80
        %v748 = vpop.permute.xlu0 %747
        %v749 = vrot.slane %v748, 7
        %v750 = vsel %vm637, %v749, %v748
        %v752 = vadd.f32 %v743, %v750
        %s753 = scalar_lea.vmem [#allocation2], 136
        %v754 = vld [vmem:[%s753] ss:$8 sm:$0x7]
        %756 = vrot.lane.b32.xlu0 %v754, 64
        %v757 = vpop.permute.xlu0 %756
        %v758 = vrot.slane %v757, 7
        %v759 = vsel %vm262, %v758, %v757
        %v761 = vadd.f32 %v752, %v759
        %v763 = vperm.slane %v761, 0
        %v764 = vperm.slane %v761, 1
        %v765 = vperm.slane %v761, 2
        %766 = vrot.lane.b32.xlu0 %v763, 32
        %v767 = vpop.permute.xlu0 %766
        %768 = vrot.lane.b32.xlu0 %v764, 32
        %v769 = vpop.permute.xlu0 %768
        %770 = vrot.lane.b32.xlu0 %v765, 32
        %v771 = vpop.permute.xlu0 %770
        %vm772 = vcmask 261120
        %v773 = vsel %vm772, %v767, %v769
        %v774 = vsel %vm772, %v769, %v771
        %v777 = vadd.f32 %v722, %v773
        %v778 = vadd.f32 %v723, %v774
        %s779 = scalar_lea.vmem [#allocation2], 37
        %v780 = vld [vmem:[%s779] ss:$8 sm:$0x7]
        %s781 = scalar_lea.vmem [#allocation2], 66
        %v782 = vld [vmem:[%s781] ss:$8 sm:$0x7]
        %784 = vrot.lane.b32.xlu0 %v782, 112
        %v785 = vpop.permute.xlu0 %784
        %v786 = vrot.slane %v785, 1
        %v787 = vsel %vm499, %v785, %v786
        %v789 = vadd.f32 %v780, %v787
        %s790 = scalar_lea.vmem [#allocation2], 79
        %v791 = vld [vmem:[%s790] ss:$8 sm:$0x7]
        %793 = vrot.lane.b32.xlu0 %v791, 96
        %v794 = vpop.permute.xlu0 %793
        %v795 = vrot.slane %v794, 7
        %v796 = vsel %vm509, %v795, %v794
        %v798 = vadd.f32 %v789, %v796
        %s799 = scalar_lea.vmem [#allocation2], 108
        %v800 = vld [vmem:[%s799] ss:$8 sm:$0x7]
        %802 = vrot.lane.b32.xlu0 %v800, 80
        %v803 = vpop.permute.xlu0 %802
        %v804 = vrot.slane %v803, 7
        %v805 = vsel %vm637, %v804, %v803
        %v807 = vadd.f32 %v798, %v805
        %s808 = scalar_lea.vmem [#allocation2], 137
        %v809 = vld [vmem:[%s808] ss:$8 sm:$0x7]
        %811 = vrot.lane.b32.xlu0 %v809, 64
        %v812 = vpop.permute.xlu0 %811
        %v813 = vrot.slane %v812, 7
        %v814 = vsel %vm262, %v813, %v812
        %v816 = vadd.f32 %v807, %v814
        %v818 = vperm.slane %v816, 0
        %v819 = vperm.slane %v816, 1
        %v820 = vperm.slane %v816, 2
        %821 = vrot.lane.b32.xlu0 %v818, 31
        %v822 = vpop.permute.xlu0 %821
        %823 = vrot.lane.b32.xlu0 %v819, 31
        %v824 = vpop.permute.xlu0 %823
        %825 = vrot.lane.b32.xlu0 %v820, 31
        %v826 = vpop.permute.xlu0 %825
        %vm827 = vcmask 252928
        %v828 = vsel %vm827, %v822, %v824
        %v829 = vsel %vm827, %v824, %v826
        %v832 = vsel %vm476, %v828, 0.0
        %v833 = vsel %vm477, %v829, 0.0
        %v834 = vadd.f32 %v777, %v832
        %v835 = vadd.f32 %v778, %v833
        %s836 = scalar_lea.vmem [#allocation2], 38
        %v837 = vld [vmem:[%s836] ss:$8 sm:$0x7]
        %s838 = scalar_lea.vmem [#allocation2], 67
        %v839 = vld [vmem:[%s838] ss:$8 sm:$0x7]
        %841 = vrot.lane.b32.xlu0 %v839, 112
        %v842 = vpop.permute.xlu0 %841
        %v843 = vrot.slane %v842, 1
        %v844 = vsel %vm499, %v842, %v843
        %v846 = vadd.f32 %v837, %v844
        %s847 = scalar_lea.vmem [#allocation2], 104
        %v848 = vld [vmem:[%s847] ss:$8 sm:$0x7]
        %850 = vrot.lane.b32.xlu0 %v848, 96
        %v851 = vpop.permute.xlu0 %850
        %v852 = vrot.slane %v851, 7
        %v853 = vsel %vm509, %v852, %v851
        %v855 = vadd.f32 %v846, %v853
        %s856 = scalar_lea.vmem [#allocation2], 109
        %v857 = vld [vmem:[%s856] ss:$8 sm:$0x7]
        %859 = vrot.lane.b32.xlu0 %v857, 80
        %v860 = vpop.permute.xlu0 %859
        %v861 = vrot.slane %v860, 7
        %v862 = vsel %vm637, %v861, %v860
        %v864 = vadd.f32 %v855, %v862
        %s865 = scalar_lea.vmem [#allocation2], 138
        %v866 = vld [vmem:[%s865] ss:$8 sm:$0x7]
        %868 = vrot.lane.b32.xlu0 %v866, 64
        %v869 = vpop.permute.xlu0 %868
        %v870 = vrot.slane %v869, 7
        %v871 = vsel %vm262, %v870, %v869
        %v873 = vadd.f32 %v864, %v871
        %v875 = vperm.slane %v873, 0
        %v876 = vperm.slane %v873, 1
        %v877 = vperm.slane %v873, 2
        %878 = vrot.lane.b32.xlu0 %v875, 30
        %v879 = vpop.permute.xlu0 %878
        %880 = vrot.lane.b32.xlu0 %v876, 30
        %v881 = vpop.permute.xlu0 %880
        %882 = vrot.lane.b32.xlu0 %v877, 30
        %v883 = vpop.permute.xlu0 %882
        %vm884 = vcmask 244736
        %v885 = vsel %vm884, %v879, %v881
        %v886 = vsel %vm884, %v881, %v883
        %v889 = vsel %vm484, %v885, 0.0
        %v890 = vsel %vm485, %v886, 0.0
        %v891 = vadd.f32 %v834, %v889
        %v892 = vadd.f32 %v835, %v890
        %v893 = vstv %s422
        %v894 = vadd.f32 %v891, %v893
        %v895 = vadd.f32 %v892, %v893
        %v896 = vmax.f32 %v894, 0.0
        %v897 = vmax.f32 %v895, 0.0
        %v898 = vstv %s423
        %v899 = vmul.f32 %v898, %v489
        %v900 = vmul.f32 %v898, %v490
        %v901 = vstv %s424
        %v902 = vmul.f32 %v901, %v609
        %v903 = vmul.f32 %v901, %v610
        %v904 = vadd.f32 %v899, %v902
        %v905 = vadd.f32 %v900, %v903
        %v906 = vstv %s425
        %v907 = vmul.f32 %v906, %v896
        %v908 = vmul.f32 %v906, %v897
        %v909 = vadd.f32 %v904, %v907
        %v910 = vadd.f32 %v905, %v908
        %v911 = vstv %s426
        %v912 = vadd.f32 %v909, %v911
        %v913 = vadd.f32 %v910, %v911
        %v914 = vxor.u32 %v912, 2147483648
        %v915 = vxor.u32 %v913, 2147483648
        %v916 = vmul.f32 %v914, 1.442695
        %v917 = vpow.pop %v916
        %v918 = vmul.f32 %v915, 1.442695
        %v919 = vpow.pop %v918
        %v920 = vadd.f32 %v917, 1.0
        %v921 = vadd.f32 %v919, 1.0
        %v922 = vrcp.pop %v920
        %v923 = vmul.f32 %v920, %v922
        %v924 = vsub.f32 1.0, %v923
        %v925 = vmul.f32 %v922, %v924
        %v926 = vadd.f32 %v922, %v925
        %vm927 = vweird.f32 %v920
        %vm928 = vweird.f32 %v922
        %vm929 = vmor %vm927, %vm928
        %v930 = vsel %vm929, %v922, %v926
        %v931 = vand.u32 2147483647, %v920
        %vm932 = vcmp.eq.f32.partialorder %v931, 8.507059e+37
        %v933 = vand.u32 %v920, 2147483648
        %v934 = vor.u32 1.1754944e-38, %v933
        %v935 = vsel %vm932, %v934, %v930
        %v936 = vmul.f32 1.0, %v935
        %v937 = vrcp.pop %v921
        %v938 = vmul.f32 %v921, %v937
        %v939 = vsub.f32 1.0, %v938
        %v940 = vmul.f32 %v937, %v939
        %v941 = vadd.f32 %v937, %v940
        %vm942 = vweird.f32 %v921
        %vm943 = vweird.f32 %v937
        %vm944 = vmor %vm942, %vm943
        %v945 = vsel %vm944, %v937, %v941
        %v946 = vand.u32 2147483647, %v921
        %vm947 = vcmp.eq.f32.partialorder %v946, 8.507059e+37
        %v948 = vand.u32 %v921, 2147483648
        %v949 = vor.u32 1.1754944e-38, %v948
        %v950 = vsel %vm947, %v949, %v945
        %v951 = vmul.f32 1.0, %v950
        %v952 = vsub.f32 1.0, %v936
        %v953 = vsub.f32 1.0, %v951
        %v954 = vperm.slane %v952, 0
        %v955 = vperm.slane %v953, 0
        %v956 = vmul.f32 %v239, %v954
        %v957 = vmul.f32 %v240, %v955
        %v958 = vmul.f32 %v241, %v954
        %v959 = vmul.f32 %v242, %v955
        %v960 = vmul.f32 %v243, %v954
        %v961 = vmul.f32 %v244, %v955
        %v962 = vmul.f32 %v245, %v954
        %v963 = vmul.f32 %v246, %v955
        %v964 = vmul.f32 %v247, %v954
        %v965 = vmul.f32 %v248, %v955
        %v966 = vmul.f32 %v249, %v954
        %v967 = vmul.f32 %v250, %v955
        %v968 = vmul.f32 %v251, %v954
        %v969 = vmul.f32 %v252, %v955
        %v970 = vmul.f32 %v253, %v954
        %v971 = vmul.f32 %v254, %v955
        %972 = vst [vmem:[%s238] sm:$0xff] %v956
        %973 = vst [vmem:[%s238 + $0x8] sm:$0xff] %v957
        %974 = vst [vmem:[%s238 + $0x10] sm:$0xff] %v958
        %975 = vst [vmem:[%s238 + $0x18] sm:$0xff] %v959
        %976 = vst [vmem:[%s238 + $0x20] sm:$0xff] %v960
        %977 = vst [vmem:[%s238 + $0x28] sm:$0xff] %v961
        %978 = vst [vmem:[%s238 + $0x30] sm:$0xff] %v962
        %979 = vst [vmem:[%s238 + $0x38] sm:$0xff] %v963
        %980 = vst [vmem:[%s238 + $0x40] sm:$0xff] %v964
        %981 = vst [vmem:[%s238 + $0x48] sm:$0xff] %v965
        %982 = vst [vmem:[%s238 + $0x50] sm:$0xff] %v966
        %983 = vst [vmem:[%s238 + $0x58] sm:$0xff] %v967
        %984 = vst [vmem:[%s238 + $0x60] sm:$0xff] %v968
        %985 = vst [vmem:[%s238 + $0x68] sm:$0xff] %v969
        %986 = vst [vmem:[%s238 + $0x70] sm:$0xff] %v970
        %987 = vst [vmem:[%s238 + $0x78] sm:$0xff] %v971
        %p988 = scmp.lt.s32.totalorder %s17, 1
        %s989 = scalar_select %p988, %s17, 1
        %s990 = smul.addr %s989, 16
        %s991 = smul.addr %s990, 8
        %s992 = scalar_lea.vmem %s5, %s991
        // Predicated region
        $region45: #{mmca_forward.1} parent=39 // pred_check
          %p993 = pneg %p145
        $region46: #{mmca_forward.1} parent=39 // pred_check_branch
          %995 = sbr.rel (%p993) target = $region48
        $region47: #{mmca_forward.1} parent=39 // pred_region
          _
        $region48: #{mmca_forward.1} parent=39 // pred_fallthru
          _
      $region40: #{mmca_forward.1} parent=5 // pred_fallthru
        _
      %p996 = scmp.le.s32.totalorder 2, %s12
      // Predicated region
      $region49: #{mmca_forward.1} parent=5 // pred_check
        %p997 = pneg %p996
      $region50: #{mmca_forward.1} parent=5 // pred_check_branch
        %999 = sbr.rel (%p997) target = $region52
      $region51: #{mmca_forward.1} parent=5 // pred_region
        %s1000 = ssub.s32 %s12, 2
        // Predicated region
        $region53: #{mmca_forward.1} parent=51 // pred_check
          %p1001 = pneg %p151
        $region54: #{mmca_forward.1} parent=51 // pred_check_branch
          %1003 = sbr.rel (%p1001) target = $region56
        $region55: #{mmca_forward.1} parent=51 // pred_region
          %p1004 = scmp.lt.s32.totalorder %s18, 1
          %s1005 = scalar_select %p1004, %s18, 1
          %s1006 = smul.addr %s1005, 16
          %s1007 = smul.addr %s1006, 8
          %s1008 = scalar_lea.vmem %s5, %s1007
        $region56: #{mmca_forward.1} parent=51 // pred_fallthru
          _
      $region52: #{mmca_forward.1} parent=5 // pred_fallthru
        _
    $region6: #{mmca_forward.1} parent=1 // loop_footer
      %s16 = sadd.s32 1, %s12
    $region7: #{mmca_forward.1} parent=1 // loop_footer_branch
      %11 = sbr.rel target = $region3
    $region8: #{mmca_forward.1} parent=1 // loop_exit
      _
    %1009 = vsyncpa [#allocation4], 1
    %s1010 = scalar_lea.sflag [#allocation4], 1
    %1011 = vsyncpa %s1010, 1

</llo_original>
